<compile_context>
chip_gen: v7x
topology: tpu7x:2x2x1
jax: 0.10.0
libtpu: 0.0.40
codegen_flags: <defaults>
</compile_context>

<pallas_src>
import jax
import jax.numpy as jnp
import numpy as np
from jax.experimental import pallas as pl
from jax.experimental.pallas import tpu as pltpu

LN_EPS = 1e-5  # PyTorch nn.LayerNorm default


def _round_up(v, m):
    return ((v + m - 1) // m) * m


def _vmem_capacity_bytes():
    """Per-generation VMEM capacity (v5e/v6e 128 MiB, v7x 64 MiB)."""
    try:
        info = pltpu.get_tpu_info()
        cap = int(getattr(info, "vmem_capacity_bytes", 0))
        if cap > 0:
            return cap
    except Exception:
        pass
    return 64 * 1024 * 1024  # conservative fallback (v7x-sized)


# ----------------------------------------------------------------------------
# Fused TokenLearner kernel: grid = (learner, batch tile)
# ----------------------------------------------------------------------------
def token_learner_kernel(x_ref, wf_ref, wl_ref, bf_ref, ln2_g_ref, ln2_b_ref,
                         out_ref):
    x = x_ref[...]                                        # (TB, S, D) f32
    TB, S, D = x.shape

    # token_norm: mean/var in f32; affine (gamma/beta) folded into the weights.
    mu = jnp.mean(x, axis=-1, keepdims=True)
    var = jnp.mean((x - mu) ** 2, axis=-1, keepdims=True)
    xhat = (x - mu) * jax.lax.rsqrt(var + LN_EPS)
    xh = xhat.astype(jnp.bfloat16).reshape(TB * S, D)     # bf16 MXU operand

    wf = wf_ref[0]            # (D, D) bf16: gamma-folded block-diag feat conv
    wl = wl_ref[0]            # (D, T) bf16: gamma-folded conv1 @ conv2 fold
    T = wl.shape[1]

    # feat: grouped 1x1 conv == block-diagonal matmul; add beta @ wf bias.
    feat = (jnp.dot(xh, wf, preferred_element_type=jnp.float32)
            + bf_ref[0]).reshape(TB, S, D)                # (TB, S, D) f32

    # token logits; LN1-beta term is constant over S -> cancels in the softmax.
    logits = jnp.dot(xh, wl, preferred_element_type=jnp.float32).reshape(TB, S, T)
    logits = jnp.swapaxes(logits, 1, 2)                   # (TB, T, S): softmax axis on lanes

    m = jnp.max(logits, axis=-1, keepdims=True)
    e = jnp.exp(logits - m)
    sel = e / jnp.sum(e, axis=-1, keepdims=True)          # exact recip (PyTorch parity)

    # einsum('...si,...id->...sd', selected, feat) == 'bts,bsd->btd':
    # clean batched (T,S) x (S,D) MXU matmul, no implicit transpose of sel.
    ctx = jnp.einsum('bts,bsd->btd',
                     sel.astype(jnp.bfloat16), feat.astype(jnp.bfloat16),
                     preferred_element_type=jnp.float32)  # (TB, T, D)

    # norm: LayerNorm over D (f32)
    mu2 = jnp.mean(ctx, axis=-1, keepdims=True)
    var2 = jnp.mean((ctx - mu2) ** 2, axis=-1, keepdims=True)
    ctxn = (ctx - mu2) * jax.lax.rsqrt(var2 + LN_EPS)
    out_ref[0] = ctxn * ln2_g_ref[0] + ln2_b_ref[0]


def _choose_batch_tile(B, S, D, T, budget_bytes):
    """Largest divisor of B whose per-step VMEM footprint fits the budget."""
    # per-batch-element estimate: x (dbl-buf in) + xhat(f32+bf16) + feat(f32+bf16)
    # + logits/e/sel + ctx + out (dbl-buf).
    per_b = 20 * S * D + 14 * S * T + 16 * T * D
    weights = 2 * (2 * D * D + 2 * D * T + 12 * D)   # dbl-buffered bf16 wf/wl + f32 vectors
    for tb in range(B, 0, -1):
        if B % tb == 0 and tb * per_b + weights <= budget_bytes:
            return tb
    return 1


def token_learners_forward(x, tl):
    """Run all L token learners. Returns (L, B, T, D) f32."""
    B, S, D = x.shape
    L, _, T = tl["wl"].shape
    cap = _vmem_capacity_bytes()
    budget = int(cap * 0.6)                      # headroom, esp. v7x's 64 MiB
    tb = _choose_batch_tile(B, S, D, T, budget)
    vmem_limit = int(min(cap * 0.9, max(budget, 32 * 1024 * 1024)))

    out = pl.pallas_call(
        token_learner_kernel,
        out_shape=jax.ShapeDtypeStruct((L, B, T, D), jnp.float32),
        grid=(L, B // tb),
        in_specs=[
            pl.BlockSpec((tb, S, D), lambda l, b: (b, 0, 0)),   # x batch tile
            pl.BlockSpec((1, D, D), lambda l, b: (l, 0, 0)),    # wf (bf16, gamma folded)
            pl.BlockSpec((1, D, T), lambda l, b: (l, 0, 0)),    # wl (bf16, gamma folded)
            pl.BlockSpec((1, 1, D), lambda l, b: (l, 0, 0)),    # feat bias (beta @ wf, f32)
            pl.BlockSpec((1, 1, D), lambda l, b: (l, 0, 0)),    # ln2 gamma
            pl.BlockSpec((1, 1, D), lambda l, b: (l, 0, 0)),    # ln2 beta
        ],
        out_specs=pl.BlockSpec((1, tb, T, D), lambda l, b: (l, b, 0, 0)),
        compiler_params=pltpu.CompilerParams(
            dimension_semantics=("parallel", "parallel"),       # megacore splits L*B/TB
            vmem_limit_bytes=vmem_limit),
    )(x, tl["wf"], tl["wl"], tl["bf"], tl["ln2_g"], tl["ln2_b"])
    return out


# ----------------------------------------------------------------------------
# Linear head kernel: y = x @ W + b, tiled over the (possibly huge) vocab dim
# ----------------------------------------------------------------------------
def head_kernel(x_ref, w_ref, b_ref, o_ref):
    o_ref[...] = (jnp.dot(x_ref[...], w_ref[...],
                          preferred_element_type=jnp.float32)
                  + b_ref[...]).astype(o_ref.dtype)


def prepare_head(w, b, tile_v=1024, out_dtype=jnp.bfloat16):
    """One-time padding + bf16 cast of head weights (no per-call pads)."""
    D, V = w.shape
    tv = int(min(tile_v, _round_up(V, 128)))     # small heads get one small tile
    Vp = _round_up(V, tv)
    return {
        "w": jnp.pad(w, ((0, 0), (0, Vp - V))).astype(jnp.bfloat16),
        "b": jnp.pad(b, (0, Vp - V)).reshape(1, Vp).astype(jnp.float32),
        "V": int(V), "tile_v": tv, "out_dtype": out_dtype,
    }


def linear_head(x, head, weight_buffers=2):
    # x: (M, D) f32, head["w"]: (D, Vp) bf16, head["b"]: (1, Vp) f32
    M, D = x.shape
    w, b = head["w"], head["b"]
    V, tv, out_dtype = head["V"], head["tile_v"], head["out_dtype"]
    Vp = w.shape[1]
    out_bytes = jnp.dtype(out_dtype).itemsize
    x16 = x.astype(jnp.bfloat16)

    # Actual buffer bytes (+30% headroom), capped per generation.
    cap = _vmem_capacity_bytes()
    need = (2 * M * D * 2                         # resident x (counted double-buffered)
            + weight_buffers * D * tv * 2         # streaming bf16 weight tiles
            + 2 * tv * 4                          # bias tiles
            + 2 * M * tv * out_bytes)             # output tiles
    vmem_limit = int(min(max(int(need * 1.3), 16 * 1024 * 1024), int(cap * 0.9)))

    if weight_buffers != 2:
        # v5e option: deeper weight pipelining if DMA waits are exposed.
        w_spec = pl.BlockSpec((D, tv), lambda j: (0, j),
                              pipeline_mode=pl.Buffered(weight_buffers))
    else:
        w_spec = pl.BlockSpec((D, tv), lambda j: (0, j))

    out = pl.pallas_call(
        head_kernel,
        out_shape=jax.ShapeDtypeStruct((M, Vp), out_dtype),
        grid=(Vp // tv,),
        in_specs=[
            pl.BlockSpec((M, D), lambda j: (0, 0)),
            w_spec,
            pl.BlockSpec((1, tv), lambda j: (0, j)),
        ],
        out_specs=pl.BlockSpec((M, tv), lambda j: (0, j)),
        compiler_params=pltpu.CompilerParams(
            dimension_semantics=("parallel",),     # v7x: both TCs split V tiles
            vmem_limit_bytes=vmem_limit),
        cost_estimate=pl.CostEstimate(
            flops=2 * M * D * Vp, transcendentals=0,
            bytes_accessed=D * Vp * 2 + M * D * 2 + Vp * 4 + M * Vp * out_bytes),
    )(x16, w, b)
    return out if Vp == V else out[:, :V]


# ----------------------------------------------------------------------------
# Parameter construction (deterministic, matches the PyTorch module's shapes)
# ----------------------------------------------------------------------------
def grouped_conv_to_dense(w, groups=8):
    # Conv2d(D, D, 1, groups=g) weight squeezed to (D_out, D_in/g) -> dense
    # block-diagonal (D_in, D_out) so y = x @ dense.  Kept dense (not per-group
    # dots) so the MXU stays full-width; revisit only if TL becomes MXU-bound.
    D, Dg = w.shape
    dense = jnp.zeros((D, D), dtype=w.dtype)
    for g in range(groups):
        blk = w[g * Dg:(g + 1) * Dg, :]                       # (Dg_out, Dg_in)
        dense = dense.at[g * Dg:(g + 1) * Dg, g * Dg:(g + 1) * Dg].set(blk.T)
    return dense


def init_token_learner_raw(key, D, T):
    ks = jax.random.split(key, 7)
    conv1 = jax.random.normal(ks[0], (D, D // 8), jnp.float32) * 0.2  # Conv2d(D,D,1,g=8)
    conv2 = jax.random.normal(ks[1], (T, D), jnp.float32) * 0.2       # Conv2d(D,T,1)
    featw = jax.random.normal(ks[2], (D, D // 8), jnp.float32) * 0.2  # Conv2d(D,D,1,g=8)
    return {
        "ln1_g": 1.0 + 0.05 * jax.random.normal(ks[3], (D,), jnp.float32),
        "ln1_b": 0.05 * jax.random.normal(ks[4], (D,), jnp.float32),
        "w1_dense": grouped_conv_to_dense(conv1),
        "w2t": conv2,
        "wf_dense": grouped_conv_to_dense(featw),
        "ln2_g": 1.0 + 0.05 * jax.random.normal(ks[5], (D,), jnp.float32),
        "ln2_b": 0.05 * jax.random.normal(ks[6], (D,), jnp.float32),
    }


def stack_token_learners(raws):
    """Stack per-learner params; fold LN1 affine + (conv1 @ conv2) at init.

    xn = xhat*g + b  =>  xn @ W = xhat @ (g[:,None] * W) + (b @ W).
    The `b @ W` bias of the token-logit branch is constant over the spatial
    axis, so it cancels in the softmax and is dropped.
    """
    L = len(raws)
    D = raws[0]["w1_dense"].shape[0]
    wf, wl, bf = [], [], []
    for r in raws:
        g, b = r["ln1_g"], r["ln1_b"]
        wl_full = r["w1_dense"] @ r["w2t"].T                  # (D, T)
        wf.append((g[:, None] * r["wf_dense"]).astype(jnp.bfloat16))
        wl.append((g[:, None] * wl_full).astype(jnp.bfloat16))
        bf.append(b @ r["wf_dense"])
    return {
        "wf": jnp.stack(wf),                                  # (L, D, D) bf16
        "wl": jnp.stack(wl),                                  # (L, D, T) bf16
        "bf": jnp.stack(bf).reshape(L, 1, D).astype(jnp.float32),
        "ln2_g": jnp.stack([r["ln2_g"] for r in raws]).reshape(L, 1, D),
        "ln2_b": jnp.stack([r["ln2_b"] for r in raws]).reshape(L, 1, D),
    }


def init_linear(key, D, V):
    kw, kb = jax.random.split(key)
    w = jax.random.normal(kw, (D, V), jnp.float32) * 0.1      # stored as (in, out)
    b = jax.random.normal(kb, (V,), jnp.float32) * 0.01
    return w, b


def init_mgp_decoder(key, in_channels, out_channels, max_len=25, only_char=False,
                     tile_v=1024, head_out_dtype=jnp.bfloat16):
    # NOTE: keep in_channels a multiple of 128 for lane-dense loads/stores.
    D = in_channels
    T = max_len + 2
    n_learners = 1 if only_char else 3
    ks = jax.random.split(key, 8)
    raws = [init_token_learner_raw(ks[i], D, T) for i in range(n_learners)]
    head_raw = [init_linear(ks[4], D, out_channels)]
    if not only_char:
        head_raw.append(init_linear(ks[5], D, 50257))   # GPT-2 BPE vocab
        head_raw.append(init_linear(ks[6], D, 30522))   # BERT wordpiece vocab
    heads = [prepare_head(w, b, tile_v, head_out_dtype) for w, b in head_raw]
    return {
        "tl": stack_token_learners(raws),
        "heads": heads,
        "only_char": only_char,
        "_ref_tl": raws,           # original f32 weights, used only by the reference
        "_ref_heads": head_raw,    # original f32 weights, used only by the reference
    }


# ----------------------------------------------------------------------------
# MGPDecoder forward
# ----------------------------------------------------------------------------
def mgp_decoder_forward(x, params, training=True):
    tl_out = token_learners_forward(x, params["tl"])          # (L, B, T, D) f32
    _, B, T, D = tl_out.shape
    outs = [linear_head(tl_out[i].reshape(B * T, D), h).reshape(B, T, -1)
            for i, h in enumerate(params["heads"])]
    if params["only_char"]:
        return outs[0] if training else jax.nn.softmax(outs[0], -1)
    if training:                    # fresh nn.Module is in training mode -> raw logits
        return outs
    # TODO(synk): fuse the eval softmax (two-pass max/sum) into the V-tiled head
    # kernel to avoid extra HBM passes over the big-vocab logits tensors.
    return [jax.nn.softmax(o, -1) for o in outs]


# ----------------------------------------------------------------------------
# Pure-JAX f32 reference (original, unfolded weights; exact softmax)
# ----------------------------------------------------------------------------
def token_learner_ref(x, r):
    mu = x.mean(-1, keepdims=True)
    var = ((x - mu) ** 2).mean(-1, keepdims=True)
    xn = (x - mu) / jnp.sqrt(var + LN_EPS) * r["ln1_g"] + r["ln1_b"]
    logits = jnp.einsum("bsd,td->bts", xn @ r["w1_dense"], r["w2t"])
    sel = jax.nn.softmax(logits, -1)
    feat = xn @ r["wf_dense"]
    ctx = jnp.einsum("bts,bsd->btd", sel, feat)
    mu2 = ctx.mean(-1, keepdims=True)
    var2 = ((ctx - mu2) ** 2).mean(-1, keepdims=True)
    return (ctx - mu2) / jnp.sqrt(var2 + LN_EPS) * r["ln2_g"] + r["ln2_b"]


def mgp_decoder_ref(x, params):
    outs = []
    for r, (w, b) in zip(params["_ref_tl"], params["_ref_heads"]):
        ctxn = token_learner_ref(x, r)
        B, T, D = ctxn.shape
        outs.append((ctxn.reshape(B * T, D) @ w + b).reshape(B, T, -1))
    return outs


if __name__ == "__main__":
    B, S, D = 2, 16, 128         # batch, spatial tokens (H*W), embed dim (lane-aligned)
    num_classes = 40
    max_len = 6                  # -> batch_max_length (T) = 8 tokens

    key = jax.random.PRNGKey(0)
    kp, kx = jax.random.split(key)
    params = init_mgp_decoder(kp, in_channels=D, out_channels=num_classes,
                              max_len=max_len, only_char=False)
    x = jax.random.normal(kx, (B, S, D), jnp.float32)

    # Token-learner kernel vs full-precision reference (bounds bf16/MXU error)
    tl_out = jax.block_until_ready(token_learners_forward(x, params["tl"]))
    for i, r in enumerate(params["_ref_tl"]):
        np.testing.assert_allclose(
            np.asarray(tl_out[i], dtype=np.float32),
            np.asarray(token_learner_ref(x, r), dtype=np.float32),
            rtol=5e-2, atol=7.5e-2)

    # Full forward (jit so the three independent head kernels can overlap)
    fwd = jax.jit(lambda xx: mgp_decoder_forward(xx, params, training=True))
    outs = jax.block_until_ready(fwd(x))

    refs = mgp_decoder_ref(x, params)
    for o, r in zip(outs, refs):
        np.testing.assert_allclose(np.asarray(o, dtype=np.float32),
                                   np.asarray(r, dtype=np.float32),
                                   rtol=5e-2, atol=1.5e-1)

    print("KERNEL_OK")
</pallas_src>

<mosaic_0001>
module attributes {stable_mosaic.version = 11 : i64} {
  func.func @token_learner_kernel(%arg0: i32, %arg1: i32, %arg2: memref<2x16x128xf32, #tpu.memory_space<vmem>>, %arg3: memref<1x128x128xbf16, #tpu.memory_space<vmem>>, %arg4: memref<1x128x8xbf16, #tpu.memory_space<vmem>>, %arg5: memref<1x1x128xf32, #tpu.memory_space<vmem>>, %arg6: memref<1x1x128xf32, #tpu.memory_space<vmem>>, %arg7: memref<1x1x128xf32, #tpu.memory_space<vmem>>, %arg8: memref<1x2x8x128xf32, #tpu.memory_space<vmem>>) attributes {dimension_semantics = [#tpu.dimension_semantics<parallel>, #tpu.dimension_semantics<parallel>], iteration_bounds = array<i64: 3, 1>, scalar_prefetch = 0 : i64, scratch_operands = 0 : i64, tpu.core_type = #tpu.core_type<tc>, window_params = [{transform_indices = @transform_0, window_bounds = array<i64: 2, 16, 128>}, {transform_indices = @transform_1, window_bounds = array<i64: 1, 128, 128>}, {transform_indices = @transform_2, window_bounds = array<i64: 1, 128, 8>}, {transform_indices = @transform_3, window_bounds = array<i64: 1, 1, 128>}, {transform_indices = @transform_4, window_bounds = array<i64: 1, 1, 128>}, {transform_indices = @transform_5, window_bounds = array<i64: 1, 1, 128>}, {transform_indices = @transform_6, window_bounds = array<i64: 1, 2, 8, 128>}]} {
    %c0 = arith.constant 0 : index
    %c0_0 = arith.constant 0 : index
    %c0_1 = arith.constant 0 : index
    %0 = vector.load %arg2[%c0, %c0_0, %c0_1] : memref<2x16x128xf32, #tpu.memory_space<vmem>>, vector<2x16x128xf32>
    %cst = arith.constant dense<0.000000e+00> : vector<2x16xf32>
    %1 = vector.multi_reduction <add>, %0, %cst [2] : vector<2x16x128xf32> to vector<2x16xf32>
    %2 = vector.shape_cast %1 : vector<2x16xf32> to vector<2x16x1xf32>
    %cst_2 = arith.constant 1.280000e+02 : f32
    %3 = vector.broadcast %cst_2 : f32 to vector<2x16x1xf32>
    %4 = arith.divf %2, %3 : vector<2x16x1xf32>
    %5 = vector.broadcast %4 : vector<2x16x1xf32> to vector<2x16x128xf32>
    %6 = arith.subf %0, %5 : vector<2x16x128xf32>
    %7 = arith.mulf %6, %6 : vector<2x16x128xf32>
    %cst_3 = arith.constant dense<0.000000e+00> : vector<2x16xf32>
    %8 = vector.multi_reduction <add>, %7, %cst_3 [2] : vector<2x16x128xf32> to vector<2x16xf32>
    %9 = vector.shape_cast %8 : vector<2x16xf32> to vector<2x16x1xf32>
    %cst_4 = arith.constant 1.280000e+02 : f32
    %10 = vector.broadcast %cst_4 : f32 to vector<2x16x1xf32>
    %11 = arith.divf %9, %10 : vector<2x16x1xf32>
    %12 = vector.broadcast %4 : vector<2x16x1xf32> to vector<2x16x128xf32>
    %13 = arith.subf %0, %12 : vector<2x16x128xf32>
    %cst_5 = arith.constant 9.99999974E-6 : f32
    %14 = vector.broadcast %cst_5 : f32 to vector<2x16x1xf32>
    %15 = arith.addf %11, %14 : vector<2x16x1xf32>
    %16 = math.rsqrt %15 : vector<2x16x1xf32>
    %17 = vector.broadcast %16 : vector<2x16x1xf32> to vector<2x16x128xf32>
    %18 = arith.mulf %13, %17 : vector<2x16x128xf32>
    %19 = arith.truncf %18 : vector<2x16x128xf32> to vector<2x16x128xbf16>
    %20 = vector.shape_cast %19 : vector<2x16x128xbf16> to vector<32x128xbf16>
    %c0_6 = arith.constant 0 : index
    %c0_7 = arith.constant 0 : index
    %c0_8 = arith.constant 0 : index
    %21 = vector.load %arg3[%c0_6, %c0_7, %c0_8] : memref<1x128x128xbf16, #tpu.memory_space<vmem>>, vector<1x128x128xbf16>
    %22 = vector.shape_cast %21 : vector<1x128x128xbf16> to vector<128x128xbf16>
    %c0_9 = arith.constant 0 : index
    %c0_10 = arith.constant 0 : index
    %c0_11 = arith.constant 0 : index
    %23 = vector.load %arg4[%c0_9, %c0_10, %c0_11] : memref<1x128x8xbf16, #tpu.memory_space<vmem>>, vector<1x128x8xbf16>
    %24 = vector.shape_cast %23 : vector<1x128x8xbf16> to vector<128x8xbf16>
    %cst_12 = arith.constant dense<0.000000e+00> : vector<32x128xf32>
    %25 = tpu.matmul %20, %22, %cst_12 {dimension_numbers = #tpu.dot_dimension_numbers<[1], [0], [0], [1], [0, 0, 1, 1], [], []>} : vector<32x128xbf16>, vector<128x128xbf16>, vector<32x128xf32> -> vector<32x128xf32>
    %c0_13 = arith.constant 0 : index
    %c0_14 = arith.constant 0 : index
    %c0_15 = arith.constant 0 : index
    %26 = vector.load %arg5[%c0_13, %c0_14, %c0_15] : memref<1x1x128xf32, #tpu.memory_space<vmem>>, vector<1x1x128xf32>
    %27 = vector.shape_cast %26 : vector<1x1x128xf32> to vector<1x128xf32>
    %28 = vector.broadcast %27 : vector<1x128xf32> to vector<32x128xf32>
    %29 = arith.addf %25, %28 : vector<32x128xf32>
    %30 = vector.shape_cast %29 : vector<32x128xf32> to vector<2x16x128xf32>
    %cst_16 = arith.constant dense<0.000000e+00> : vector<32x8xf32>
    %31 = tpu.matmul %20, %24, %cst_16 {dimension_numbers = #tpu.dot_dimension_numbers<[1], [0], [0], [1], [0, 0, 1, 1], [], []>} : vector<32x128xbf16>, vector<128x8xbf16>, vector<32x8xf32> -> vector<32x8xf32>
    %32 = vector.shape_cast %31 : vector<32x8xf32> to vector<2x16x8xf32>
    %33 = tpu.transpose %32, [0, 2, 1] : vector<2x16x8xf32> -> vector<2x8x16xf32>
    %cst_17 = arith.constant dense<0xFF800000> : vector<2x8xf32>
    %34 = vector.multi_reduction <maximumf>, %33, %cst_17 [2] : vector<2x8x16xf32> to vector<2x8xf32>
    %35 = vector.shape_cast %34 : vector<2x8xf32> to vector<2x8x1xf32>
    %36 = vector.broadcast %35 : vector<2x8x1xf32> to vector<2x8x16xf32>
    %37 = arith.subf %33, %36 : vector<2x8x16xf32>
    %38 = math.exp %37 : vector<2x8x16xf32>
    %cst_18 = arith.constant dense<0.000000e+00> : vector<2x8xf32>
    %39 = vector.multi_reduction <add>, %38, %cst_18 [2] : vector<2x8x16xf32> to vector<2x8xf32>
    %40 = vector.shape_cast %39 : vector<2x8xf32> to vector<2x8x1xf32>
    %41 = vector.broadcast %40 : vector<2x8x1xf32> to vector<2x8x16xf32>
    %42 = arith.divf %38, %41 : vector<2x8x16xf32>
    %43 = arith.truncf %42 : vector<2x8x16xf32> to vector<2x8x16xbf16>
    %44 = arith.truncf %30 : vector<2x16x128xf32> to vector<2x16x128xbf16>
    "tpu.trace_start"() <{level = 10 : i32, message = "bts,bsd->btd"}> : () -> ()
    %cst_19 = arith.constant dense<0.000000e+00> : vector<2x8x128xf32>
    %45 = tpu.matmul %43, %44, %cst_19 {dimension_numbers = #tpu.dot_dimension_numbers<[2], [1], [1], [2], [0, 0, 0, 1, 1, 2], [0], [0]>} : vector<2x8x16xbf16>, vector<2x16x128xbf16>, vector<2x8x128xf32> -> vector<2x8x128xf32>
    "tpu.trace_stop"() : () -> ()
    %cst_20 = arith.constant dense<0.000000e+00> : vector<2x8xf32>
    %46 = vector.multi_reduction <add>, %45, %cst_20 [2] : vector<2x8x128xf32> to vector<2x8xf32>
    %47 = vector.shape_cast %46 : vector<2x8xf32> to vector<2x8x1xf32>
    %cst_21 = arith.constant 1.280000e+02 : f32
    %48 = vector.broadcast %cst_21 : f32 to vector<2x8x1xf32>
    %49 = arith.divf %47, %48 : vector<2x8x1xf32>
    %50 = vector.broadcast %49 : vector<2x8x1xf32> to vector<2x8x128xf32>
    %51 = arith.subf %45, %50 : vector<2x8x128xf32>
    %52 = arith.mulf %51, %51 : vector<2x8x128xf32>
    %cst_22 = arith.constant dense<0.000000e+00> : vector<2x8xf32>
    %53 = vector.multi_reduction <add>, %52, %cst_22 [2] : vector<2x8x128xf32> to vector<2x8xf32>
    %54 = vector.shape_cast %53 : vector<2x8xf32> to vector<2x8x1xf32>
    %cst_23 = arith.constant 1.280000e+02 : f32
    %55 = vector.broadcast %cst_23 : f32 to vector<2x8x1xf32>
    %56 = arith.divf %54, %55 : vector<2x8x1xf32>
    %57 = vector.broadcast %49 : vector<2x8x1xf32> to vector<2x8x128xf32>
    %58 = arith.subf %45, %57 : vector<2x8x128xf32>
    %cst_24 = arith.constant 9.99999974E-6 : f32
    %59 = vector.broadcast %cst_24 : f32 to vector<2x8x1xf32>
    %60 = arith.addf %56, %59 : vector<2x8x1xf32>
    %61 = math.rsqrt %60 : vector<2x8x1xf32>
    %62 = vector.broadcast %61 : vector<2x8x1xf32> to vector<2x8x128xf32>
    %63 = arith.mulf %58, %62 : vector<2x8x128xf32>
    %c0_25 = arith.constant 0 : index
    %c0_26 = arith.constant 0 : index
    %c0_27 = arith.constant 0 : index
    %64 = vector.load %arg6[%c0_25, %c0_26, %c0_27] : memref<1x1x128xf32, #tpu.memory_space<vmem>>, vector<1x1x128xf32>
    %65 = vector.shape_cast %64 : vector<1x1x128xf32> to vector<1x128xf32>
    %66 = vector.shape_cast %65 : vector<1x128xf32> to vector<1x1x128xf32>
    %67 = vector.broadcast %66 : vector<1x1x128xf32> to vector<2x8x128xf32>
    %68 = arith.mulf %63, %67 : vector<2x8x128xf32>
    %c0_28 = arith.constant 0 : index
    %c0_29 = arith.constant 0 : index
    %c0_30 = arith.constant 0 : index
    %69 = vector.load %arg7[%c0_28, %c0_29, %c0_30] : memref<1x1x128xf32, #tpu.memory_space<vmem>>, vector<1x1x128xf32>
    %70 = vector.shape_cast %69 : vector<1x1x128xf32> to vector<1x128xf32>
    %71 = vector.shape_cast %70 : vector<1x128xf32> to vector<1x1x128xf32>
    %72 = vector.broadcast %71 : vector<1x1x128xf32> to vector<2x8x128xf32>
    %73 = arith.addf %68, %72 : vector<2x8x128xf32>
    %c0_31 = arith.constant 0 : index
    %c0_32 = arith.constant 0 : index
    %c0_33 = arith.constant 0 : index
    %c0_34 = arith.constant 0 : index
    %74 = vector.load %arg8[%c0_31, %c0_32, %c0_33, %c0_34] : memref<1x2x8x128xf32, #tpu.memory_space<vmem>>, vector<1x2x8x128xf32>
    %75 = vector.shape_cast %74 : vector<1x2x8x128xf32> to vector<2x8x128xf32>
    %76 = vector.shape_cast %73 : vector<2x8x128xf32> to vector<1x2x8x128xf32>
    tpu.vector_store %arg8[%c0_31, %c0_32, %c0_33, %c0_34], %76 {strides = array<i32>} : memref<1x2x8x128xf32, #tpu.memory_space<vmem>>, vector<1x2x8x128xf32>,
    return
  }
  func.func @transform_0(%arg0: i32, %arg1: i32) -> (i32, i32, i32) {
    %c0_i32 = arith.constant 0 : i32
    %c0_i32_0 = arith.constant 0 : i32
    %c0_i32_1 = arith.constant 0 : i32
    return %arg1, %c0_i32, %c0_i32_0 : i32, i32, i32
  }
  func.func @transform_1(%arg0: i32, %arg1: i32) -> (i32, i32, i32) {
    %c0_i32 = arith.constant 0 : i32
    %c0_i32_0 = arith.constant 0 : i32
    %c0_i32_1 = arith.constant 0 : i32
    return %arg0, %c0_i32, %c0_i32_0 : i32, i32, i32
  }
  func.func @transform_2(%arg0: i32, %arg1: i32) -> (i32, i32, i32) {
    %c0_i32 = arith.constant 0 : i32
    %c0_i32_0 = arith.constant 0 : i32
    %c0_i32_1 = arith.constant 0 : i32
    return %arg0, %c0_i32, %c0_i32_0 : i32, i32, i32
  }
  func.func @transform_3(%arg0: i32, %arg1: i32) -> (i32, i32, i32) {
    %c0_i32 = arith.constant 0 : i32
    %c0_i32_0 = arith.constant 0 : i32
    %c0_i32_1 = arith.constant 0 : i32
    return %arg0, %c0_i32, %c0_i32_0 : i32, i32, i32
  }
  func.func @transform_4(%arg0: i32, %arg1: i32) -> (i32, i32, i32) {
    %c0_i32 = arith.constant 0 : i32
    %c0_i32_0 = arith.constant 0 : i32
    %c0_i32_1 = arith.constant 0 : i32
    return %arg0, %c0_i32, %c0_i32_0 : i32, i32, i32
  }
  func.func @transform_5(%arg0: i32, %arg1: i32) -> (i32, i32, i32) {
    %c0_i32 = arith.constant 0 : i32
    %c0_i32_0 = arith.constant 0 : i32
    %c0_i32_1 = arith.constant 0 : i32
    return %arg0, %c0_i32, %c0_i32_0 : i32, i32, i32
  }
  func.func @transform_6(%arg0: i32, %arg1: i32) -> (i32, i32, i32, i32) {
    %c0_i32 = arith.constant 0 : i32
    %c0_i32_0 = arith.constant 0 : i32
    %c0_i32_1 = arith.constant 0 : i32
    return %arg0, %arg1, %c0_i32, %c0_i32_0 : i32, i32, i32, i32
  }
}

</mosaic_0001>

<llo_original>
// kernel: tpu_custom_call.1
$region0: #{tpu_custom_call.1}
  #allocation0 [shape = 'u32[]', space=smem, size = 0x4, offset = 0x4, fixed_abs, tag = 'smem constant byte address 0x4 - core index']
  #allocation1 [shape = 'u32[144,128]{1,0:T(1,128)}', space=vmem, size = 0x12000, scoped, tag = 'internal scratch']
  %s0 = inlined_call_operand.hbm [shape: f32[2,16,128], index: 0, kind: input, shape index: {}]
  %s1 = inlined_call_operand.vmem [shape: bf16[3,128,128], index: 1, kind: input, shape index: {}]
  %s2 = inlined_call_operand.vmem [shape: bf16[3,128,8], index: 2, kind: input, shape index: {}]
  %s3 = inlined_call_operand.vmem [shape: f32[3,1,128], index: 3, kind: input, shape index: {}]
  %s4 = inlined_call_operand.vmem [shape: f32[3,1,128], index: 4, kind: input, shape index: {}]
  %s5 = inlined_call_operand.vmem [shape: f32[3,1,128], index: 5, kind: input, shape index: {}]
  %s6 = inlined_call_operand.hbm [shape: f32[3,2,8,128], index: 6, kind: output, shape index: {}]
  %s7 = sld [smem:[#allocation0]]
  $region61: #{tpu_custom_call.1} parent=0
    _
  %s9 = ssub.s32 1, %s7
  %s10 = scalar_select 0, %s9, %s7
  $region1: #{tpu_custom_call.1} parent=0
    #allocation2 [shape = 'u8[16384]{0}', space=vmem, size = 0x4000, scoped, tag = 'input window, operand 0, single buffered']
    #allocation3 [shape = 's32[2]{0}', space=sflag, size = 0x8, scoped, tag = 'scoped memory for tpu_custom_call.1']
    #allocation4 [shape = 's32[2]{0}', space=sflag, size = 0x8, scoped, tag = 'scoped memory for tpu_custom_call.1']
    #allocation5 [shape = 'u8[16384]{0}', space=vmem, size = 0x4000, scoped, tag = 'output window, operand 0']
    %11 = vsyncpa [#allocation3], 0
    %12 = vsyncpa [#allocation4], 0
    %s13 = scalar_lea.sflag [#allocation4], 1
    %14 = vsyncpa %s13, 0
    loop: start=0, step=1, limit=5
    $region2: #{tpu_custom_call.1} parent=1 // loop_pre_header
      _
    $region3: #{tpu_custom_call.1} parent=1 // loop_header
      %s16 = sphi 0, %s20
      %p17 = scmp.ge.s32.totalorder %s16, 5
      %s23 = sphi 0, %s35
      %s24 = sphi 0, %s31
      %s25 = sphi 0, %s23
      %s26 = sphi 0, %s24
      %s27 = sphi 0, %s25
      %s28 = sphi 0, %s26
      %s38 = sphi 0, %s40
      %s41 = sphi 0, %s38
      %s42 = sphi 0, %s41
      %s58 = sphi 0, %s42
      %s64 = sphi 0, %s66
      %s67 = sphi 0, %s64
      %s68 = sphi 0, %s67
      %s84 = sphi 0, %s68
      %s90 = sphi 0, %s92
      %s93 = sphi 0, %s90
      %s94 = sphi 0, %s93
      %s110 = sphi 0, %s94
      %s116 = sphi 0, %s118
      %s119 = sphi 0, %s116
      %s120 = sphi 0, %s119
      %s136 = sphi 0, %s120
      %s142 = sphi 0, %s144
      %s145 = sphi 0, %s142
      %s146 = sphi 0, %s145
      %s162 = sphi 0, %s146
      %s168 = sphi 0, %s170
      %s171 = sphi 0, %s168
      %s172 = sphi 0, %s171
      %s188 = sphi 0, %s172
      %s196 = sphi 0, %s198
      %s199 = sphi 0, %s196
      %s200 = sphi 0, %s199
      %s216 = sphi 0, %s200
    $region4: #{tpu_custom_call.1} parent=1 // loop_header_branch
      %19 = sbr.rel (%p17) target = $region8
    $region5: #{tpu_custom_call.1} parent=1 // loop_body
      %s21 = ssub.s32 %s16, 1
      %s22 = ssub.s32 %s16, 2
      %s29 = sadd.s32 1, %s24
      %p30 = scmp.ge.s32.totalorder %s29, 1
      %s31 = scalar_select %p30, 0, %s29
      %s32 = sadd.s32 1, %s23
      %s33 = scalar_select %p30, %s32, %s23
      %p34 = scmp.ge.s32.totalorder %s33, 3
      %s35 = scalar_select %p34, 0, %s33
      %s36 = ssub.s32 %s24, %s31
      %p37 = scmp.eq.s32.totalorder %s36, 0
      %s39 = sadd.s32 %s38, 1
      %s40 = scalar_select %p37, %s38, %s39
      %p43 = pneg %p37
      %p44 = scmp.eq.s32.totalorder %s16, 2
      %p45 = por %p43, %p44
      %p46 = scmp.ne.s32.totalorder %s38, %s41
      %p47 = scmp.eq.s32.totalorder %s16, 0
      %p48 = por %p46, %p47
      %p49 = scmp.ne.s32.totalorder %s38, %s41
      %p50 = scmp.eq.s32.totalorder %s21, 2
      %p51 = por %p49, %p50
      %p52 = scmp.ne.s32.totalorder %s41, %s42
      %p53 = scmp.eq.s32.totalorder %s21, 0
      %p54 = por %p52, %p53
      %p55 = scmp.ne.s32.totalorder %s41, %s42
      %p56 = scmp.eq.s32.totalorder %s22, 2
      %p57 = por %p55, %p56
      %p59 = scmp.ne.s32.totalorder %s42, %s58
      %p60 = scmp.eq.s32.totalorder %s22, 0
      %p61 = por %p59, %p60
      %s62 = ssub.s32 %s23, %s35
      %p63 = scmp.eq.s32.totalorder %s62, 0
      %s65 = sadd.s32 %s64, 1
      %s66 = scalar_select %p63, %s64, %s65
      %p69 = pneg %p63
      %p70 = scmp.eq.s32.totalorder %s16, 2
      %p71 = por %p69, %p70
      %p72 = scmp.ne.s32.totalorder %s64, %s67
      %p73 = scmp.eq.s32.totalorder %s16, 0
      %p74 = por %p72, %p73
      %p75 = scmp.ne.s32.totalorder %s64, %s67
      %p76 = scmp.eq.s32.totalorder %s21, 2
      %p77 = por %p75, %p76
      %p78 = scmp.ne.s32.totalorder %s67, %s68
      %p79 = scmp.eq.s32.totalorder %s21, 0
      %p80 = por %p78, %p79
      %p81 = scmp.ne.s32.totalorder %s67, %s68
      %p82 = scmp.eq.s32.totalorder %s22, 2
      %p83 = por %p81, %p82
      %p85 = scmp.ne.s32.totalorder %s68, %s84
      %p86 = scmp.eq.s32.totalorder %s22, 0
      %p87 = por %p85, %p86
      %s88 = ssub.s32 %s23, %s35
      %p89 = scmp.eq.s32.totalorder %s88, 0
      %s91 = sadd.s32 %s90, 1
      %s92 = scalar_select %p89, %s90, %s91
      %p95 = pneg %p89
      %p96 = scmp.eq.s32.totalorder %s16, 2
      %p97 = por %p95, %p96
      %p98 = scmp.ne.s32.totalorder %s90, %s93
      %p99 = scmp.eq.s32.totalorder %s16, 0
      %p100 = por %p98, %p99
      %p101 = scmp.ne.s32.totalorder %s90, %s93
      %p102 = scmp.eq.s32.totalorder %s21, 2
      %p103 = por %p101, %p102
      %p104 = scmp.ne.s32.totalorder %s93, %s94
      %p105 = scmp.eq.s32.totalorder %s21, 0
      %p106 = por %p104, %p105
      %p107 = scmp.ne.s32.totalorder %s93, %s94
      %p108 = scmp.eq.s32.totalorder %s22, 2
      %p109 = por %p107, %p108
      %p111 = scmp.ne.s32.totalorder %s94, %s110
      %p112 = scmp.eq.s32.totalorder %s22, 0
      %p113 = por %p111, %p112
      %s114 = ssub.s32 %s23, %s35
      %p115 = scmp.eq.s32.totalorder %s114, 0
      %s117 = sadd.s32 %s116, 1
      %s118 = scalar_select %p115, %s116, %s117
      %p121 = pneg %p115
      %p122 = scmp.eq.s32.totalorder %s16, 2
      %p123 = por %p121, %p122
      %p124 = scmp.ne.s32.totalorder %s116, %s119
      %p125 = scmp.eq.s32.totalorder %s16, 0
      %p126 = por %p124, %p125
      %p127 = scmp.ne.s32.totalorder %s116, %s119
      %p128 = scmp.eq.s32.totalorder %s21, 2
      %p129 = por %p127, %p128
      %p130 = scmp.ne.s32.totalorder %s119, %s120
      %p131 = scmp.eq.s32.totalorder %s21, 0
      %p132 = por %p130, %p131
      %p133 = scmp.ne.s32.totalorder %s119, %s120
      %p134 = scmp.eq.s32.totalorder %s22, 2
      %p135 = por %p133, %p134
      %p137 = scmp.ne.s32.totalorder %s120, %s136
      %p138 = scmp.eq.s32.totalorder %s22, 0
      %p139 = por %p137, %p138
      %s140 = ssub.s32 %s23, %s35
      %p141 = scmp.eq.s32.totalorder %s140, 0
      %s143 = sadd.s32 %s142, 1
      %s144 = scalar_select %p141, %s142, %s143
      %p147 = pneg %p141
      %p148 = scmp.eq.s32.totalorder %s16, 2
      %p149 = por %p147, %p148
      %p150 = scmp.ne.s32.totalorder %s142, %s145
      %p151 = scmp.eq.s32.totalorder %s16, 0
      %p152 = por %p150, %p151
      %p153 = scmp.ne.s32.totalorder %s142, %s145
      %p154 = scmp.eq.s32.totalorder %s21, 2
      %p155 = por %p153, %p154
      %p156 = scmp.ne.s32.totalorder %s145, %s146
      %p157 = scmp.eq.s32.totalorder %s21, 0
      %p158 = por %p156, %p157
      %p159 = scmp.ne.s32.totalorder %s145, %s146
      %p160 = scmp.eq.s32.totalorder %s22, 2
      %p161 = por %p159, %p160
      %p163 = scmp.ne.s32.totalorder %s146, %s162
      %p164 = scmp.eq.s32.totalorder %s22, 0
      %p165 = por %p163, %p164
      %s166 = ssub.s32 %s23, %s35
      %p167 = scmp.eq.s32.totalorder %s166, 0
      %s169 = sadd.s32 %s168, 1
      %s170 = scalar_select %p167, %s168, %s169
      %p173 = pneg %p167
      %p174 = scmp.eq.s32.totalorder %s16, 2
      %p175 = por %p173, %p174
      %p176 = scmp.ne.s32.totalorder %s168, %s171
      %p177 = scmp.eq.s32.totalorder %s16, 0
      %p178 = por %p176, %p177
      %p179 = scmp.ne.s32.totalorder %s168, %s171
      %p180 = scmp.eq.s32.totalorder %s21, 2
      %p181 = por %p179, %p180
      %p182 = scmp.ne.s32.totalorder %s171, %s172
      %p183 = scmp.eq.s32.totalorder %s21, 0
      %p184 = por %p182, %p183
      %p185 = scmp.ne.s32.totalorder %s171, %s172
      %p186 = scmp.eq.s32.totalorder %s22, 2
      %p187 = por %p185, %p186
      %p189 = scmp.ne.s32.totalorder %s172, %s188
      %p190 = scmp.eq.s32.totalorder %s22, 0
      %p191 = por %p189, %p190
      %s192 = ssub.s32 %s23, %s35
      %s193 = ssub.s32 %s24, %s31
      %s194 = sor.u32 %s192, %s193
      %p195 = scmp.eq.s32.totalorder %s194, 0
      %s197 = sadd.s32 %s196, 1
      %s198 = scalar_select %p195, %s196, %s197
      %p201 = pneg %p195
      %p202 = scmp.eq.s32.totalorder %s16, 2
      %p203 = por %p201, %p202
      %p204 = scmp.ne.s32.totalorder %s196, %s199
      %p205 = scmp.eq.s32.totalorder %s16, 0
      %p206 = por %p204, %p205
      %p207 = scmp.ne.s32.totalorder %s196, %s199
      %p208 = scmp.eq.s32.totalorder %s21, 2
      %p209 = por %p207, %p208
      %p210 = scmp.ne.s32.totalorder %s199, %s200
      %p211 = scmp.eq.s32.totalorder %s21, 0
      %p212 = por %p210, %p211
      %p213 = scmp.ne.s32.totalorder %s199, %s200
      %p214 = scmp.eq.s32.totalorder %s22, 2
      %p215 = por %p213, %p214
      %p217 = scmp.ne.s32.totalorder %s200, %s216
      %p218 = scmp.eq.s32.totalorder %s22, 0
      %p219 = por %p217, %p218
      %p220 = scmp.le.s32.totalorder 1, %s16
      %p221 = scmp.lt.s32.totalorder %s16, 4
      %p222 = pnand %p220, %p221
      %p223 = pneg %p222
      // Predicated region
      $region9: #{tpu_custom_call.1} parent=5 // pred_check
        _
      $region10: #{tpu_custom_call.1} parent=5 // pred_check_branch
        %225 = sbr.rel (%p222) target = $region12
      $region11: #{tpu_custom_call.1} parent=5 // pred_region
        %s226 = ssub.s32 %s16, 1
        // Predicated region
        $region13: #{tpu_custom_call.1} parent=11 // pred_check
          %p227 = pneg %p54
        $region14: #{tpu_custom_call.1} parent=11 // pred_check_branch
          %229 = sbr.rel (%p227) target = $region16
        $region15: #{tpu_custom_call.1} parent=11 // pred_region
          %s230 = smul.u32 2, %s26
          %s232 = ssub.s32 512, 512
          %233 = vsyncadd [#allocation3], %s232
          %s234 = smul.addr %s230, 2
          %s235 = smul.addr %s234, 128
          %s236 = scalar_lea.hbm %s0, %s235
          %s237 = sshll.u32 [#allocation2], 4
          %s238 = int_to_ptr.vmem [resolvable:$true] %s237
          %243 = dma.hbm_to_vmem [thread:$0]  %s236, 512, %s238, [#allocation3], 128, 128, 8
        $region16: #{tpu_custom_call.1} parent=11 // pred_fallthru
          _
      $region12: #{tpu_custom_call.1} parent=5 // pred_fallthru
        _
      %p244 = scmp.lt.s32.totalorder %s16, 3
      // Predicated region
      $region17: #{tpu_custom_call.1} parent=5 // pred_check
        %p245 = pneg %p244
      $region18: #{tpu_custom_call.1} parent=5 // pred_check_branch
        %247 = sbr.rel (%p245) target = $region20
      $region19: #{tpu_custom_call.1} parent=5 // pred_region
        // Predicated region
        $region21: #{tpu_custom_call.1} parent=19 // pred_check
          %p248 = pneg %p74
        $region22: #{tpu_custom_call.1} parent=19 // pred_check_branch
          %250 = sbr.rel (%p248) target = $region24
        $region23: #{tpu_custom_call.1} parent=19 // pred_region
          %p251 = scmp.lt.s32.totalorder %s23, 2
          %s252 = scalar_select %p251, %s23, 2
          %s253 = smul.addr %s252, 16
          %s254 = smul.addr %s253, 4
          %s255 = scalar_lea.vmem %s1, %s254
        $region24: #{tpu_custom_call.1} parent=19 // pred_fallthru
          _
        // Predicated region
        $region25: #{tpu_custom_call.1} parent=19 // pred_check
          %p256 = pneg %p100
        $region26: #{tpu_custom_call.1} parent=19 // pred_check_branch
          %258 = sbr.rel (%p256) target = $region28
        $region27: #{tpu_custom_call.1} parent=19 // pred_region
          %p259 = scmp.lt.s32.totalorder %s23, 2
          %s260 = scalar_select %p259, %s23, 2
          %s261 = smul.addr %s260, 16
          %s262 = smul.addr %s261, 4
          %s263 = scalar_lea.vmem %s2, %s262
        $region28: #{tpu_custom_call.1} parent=19 // pred_fallthru
          _
        // Predicated region
        $region29: #{tpu_custom_call.1} parent=19 // pred_check
          %p264 = pneg %p126
        $region30: #{tpu_custom_call.1} parent=19 // pred_check_branch
          %266 = sbr.rel (%p264) target = $region32
        $region31: #{tpu_custom_call.1} parent=19 // pred_region
          %p267 = scmp.lt.s32.totalorder %s23, 2
          %s268 = scalar_select %p267, %s23, 2
          %s269 = scalar_lea.vmem %s3, %s268
        $region32: #{tpu_custom_call.1} parent=19 // pred_fallthru
          _
        // Predicated region
        $region33: #{tpu_custom_call.1} parent=19 // pred_check
          %p270 = pneg %p152
        $region34: #{tpu_custom_call.1} parent=19 // pred_check_branch
          %272 = sbr.rel (%p270) target = $region36
        $region35: #{tpu_custom_call.1} parent=19 // pred_region
          %p273 = scmp.lt.s32.totalorder %s23, 2
          %s274 = scalar_select %p273, %s23, 2
          %s275 = scalar_lea.vmem %s4, %s274
        $region36: #{tpu_custom_call.1} parent=19 // pred_fallthru
          _
        // Predicated region
        $region37: #{tpu_custom_call.1} parent=19 // pred_check
          %p276 = pneg %p178
        $region38: #{tpu_custom_call.1} parent=19 // pred_check_branch
          %278 = sbr.rel (%p276) target = $region40
        $region39: #{tpu_custom_call.1} parent=19 // pred_region
          %p279 = scmp.lt.s32.totalorder %s23, 2
          %s280 = scalar_select %p279, %s23, 2
          %s281 = scalar_lea.vmem %s5, %s280
        $region40: #{tpu_custom_call.1} parent=19 // pred_fallthru
          _
      $region20: #{tpu_custom_call.1} parent=5 // pred_fallthru
        _
      %p282 = scmp.le.s32.totalorder 1, %s16
      %p283 = scmp.lt.s32.totalorder %s16, 4
      %p284 = pnand %p282, %p283
      %p285 = pneg %p284
      // Predicated region
      $region41: #{tpu_custom_call.1} parent=5 // pred_check
        _
      $region42: #{tpu_custom_call.1} parent=5 // pred_check_branch
        %287 = sbr.rel (%p284) target = $region44
      $region43: #{tpu_custom_call.1} parent=5 // pred_region
        %s288 = ssub.s32 %s16, 1
        // Predicated region
        $region45: #{tpu_custom_call.1} parent=43 // pred_check
          %p289 = pneg %p54
        $region46: #{tpu_custom_call.1} parent=43 // pred_check_branch
          %291 = sbr.rel (%p289) target = $region48
        $region47: #{tpu_custom_call.1} parent=43 // pred_region
          %292 = dma.done [#allocation3], 512
        $region48: #{tpu_custom_call.1} parent=43 // pred_fallthru
          _
        %p293 = pneg %p54
        %p294 = pneg %p51
        %p295 = scmp.lt.s32.totalorder %s25, 2
        %s296 = scalar_select %p295, %s25, 2
        %s297 = smul.addr %s296, 16
        %s298 = smul.addr %s297, 4
        %s299 = scalar_lea.vmem %s1, %s298
        %p300 = pneg %p80
        %p301 = pneg %p77
        %p302 = scmp.lt.s32.totalorder %s25, 2
        %s303 = scalar_select %p302, %s25, 2
        %s304 = smul.addr %s303, 16
        %s305 = smul.addr %s304, 4
        %s306 = scalar_lea.vmem %s2, %s305
        %p307 = pneg %p106
        %p308 = pneg %p103
        %p309 = scmp.lt.s32.totalorder %s25, 2
        %s310 = scalar_select %p309, %s25, 2
        %s311 = scalar_lea.vmem %s3, %s310
        %p312 = pneg %p132
        %p313 = pneg %p129
        %p314 = scmp.lt.s32.totalorder %s25, 2
        %s315 = scalar_select %p314, %s25, 2
        %s316 = scalar_lea.vmem %s4, %s315
        %p317 = pneg %p158
        %p318 = pneg %p155
        %p319 = scmp.lt.s32.totalorder %s25, 2
        %s320 = scalar_select %p319, %s25, 2
        %s321 = scalar_lea.vmem %s5, %s320
        %p322 = pneg %p184
        %p323 = pneg %p181
        %p324 = pneg %p212
        %p325 = pneg %p209
        %s326 = sand.u32 %s199, 1
        %s327 = scalar_lea.sflag [#allocation4], %s326
        %s328 = sand.u32 %s199, 1
        %s329 = smul.addr %s328, 16
        %s330 = scalar_lea.vmem [#allocation5], %s329
        %s331 = smul.u32 2, %s26
        %p332 = scmp.lt.s32.totalorder %s25, 2
        %s333 = scalar_select %p332, %s25, 2
        %s334 = smul.addr %s333, 16
        %s335 = smul.addr %s334, 4
        %s336 = scalar_lea.vmem %s1, %s335
        %p337 = scmp.lt.s32.totalorder %s25, 2
        %s338 = scalar_select %p337, %s25, 2
        %s339 = smul.addr %s338, 16
        %s340 = smul.addr %s339, 4
        %s341 = scalar_lea.vmem %s2, %s340
        %p342 = scmp.lt.s32.totalorder %s25, 2
        %s343 = scalar_select %p342, %s25, 2
        %s344 = scalar_lea.vmem %s3, %s343
        %p345 = scmp.lt.s32.totalorder %s25, 2
        %s346 = scalar_select %p345, %s25, 2
        %s347 = scalar_lea.vmem %s4, %s346
        %p348 = scmp.lt.s32.totalorder %s25, 2
        %s349 = scalar_select %p348, %s25, 2
        %s350 = scalar_lea.vmem %s5, %s349
        %s351 = smul.u32 2, %s26
        %v353 = vld [vmem:[#allocation2] sm:$0xff]
        %v354 = vld [vmem:[#allocation2 + $0x8] sm:$0xff]
        %v355 = vld [vmem:[#allocation2 + $0x10] sm:$0xff]
        %v356 = vld [vmem:[#allocation2 + $0x18] sm:$0xff]
        %357 = vadd.xlane.f32.xlu0 %v353
        %v358 = vpop.xlane.xlu0 %357
        %359 = vadd.xlane.f32.xlu0 %v354
        %v360 = vpop.xlane.xlu0 %359
        %361 = vadd.xlane.f32.xlu0 %v355
        %v362 = vpop.xlane.xlu0 %361
        %363 = vadd.xlane.f32.xlu0 %v356
        %v364 = vpop.xlane.xlu0 %363
        %v365 = vrcp.pop 128.0
        %v366 = vmul.f32 %v358, %v365
        %v367 = vmul.f32 %v360, %v365
        %v368 = vmul.f32 %v362, %v365
        %v369 = vmul.f32 %v364, %v365
        %v370 = vsub.f32 %v353, %v366
        %v371 = vsub.f32 %v354, %v367
        %v372 = vsub.f32 %v355, %v368
        %v373 = vsub.f32 %v356, %v369
        %v374 = vmul.f32 %v370, %v370
        %v375 = vmul.f32 %v371, %v371
        %v376 = vmul.f32 %v372, %v372
        %v377 = vmul.f32 %v373, %v373
        %378 = vadd.xlane.f32.xlu0 %v374
        %v379 = vpop.xlane.xlu0 %378
        %380 = vadd.xlane.f32.xlu0 %v375
        %v381 = vpop.xlane.xlu0 %380
        %382 = vadd.xlane.f32.xlu0 %v376
        %v383 = vpop.xlane.xlu0 %382
        %384 = vadd.xlane.f32.xlu0 %v377
        %v385 = vpop.xlane.xlu0 %384
        %v386 = vmul.f32 %v379, %v365
        %v387 = vmul.f32 %v381, %v365
        %v388 = vmul.f32 %v383, %v365
        %v389 = vmul.f32 %v385, %v365
        %v390 = vadd.f32 %v386, 1e-05
        %v391 = vadd.f32 %v387, 1e-05
        %v392 = vadd.f32 %v388, 1e-05
        %v393 = vadd.f32 %v389, 1e-05
        %v394 = vrsqrt.pop %v390
        %v395 = vrsqrt.pop %v391
        %v396 = vrsqrt.pop %v392
        %v397 = vrsqrt.pop %v393
        %v398 = vmul.f32 %v370, %v394
        %v399 = vmul.f32 %v371, %v395
        %v400 = vmul.f32 %v372, %v396
        %v401 = vmul.f32 %v373, %v397
        %v402 = vpack.c.bf16 %v399, %v398
        %v403 = vpack.c.bf16 %v401, %v400
        %v404 = vld [vmem:[%s336] sm:$0xf]
        %v405 = vld [vmem:[%s336 + $0x4] sm:$0xf]
        %v406 = vld [vmem:[%s336 + $0x8] sm:$0xf]
        %v407 = vld [vmem:[%s336 + $0xc] sm:$0xf]
        %v408 = vld [vmem:[%s336 + $0x10] sm:$0xf]
        %v409 = vld [vmem:[%s336 + $0x14] sm:$0xf]
        %v410 = vld [vmem:[%s336 + $0x18] sm:$0xf]
        %v411 = vld [vmem:[%s336 + $0x1c] sm:$0xf]
        %v412 = vld [vmem:[%s336 + $0x20] sm:$0xf]
        %v413 = vld [vmem:[%s336 + $0x24] sm:$0xf]
        %v414 = vld [vmem:[%s336 + $0x28] sm:$0xf]
        %v415 = vld [vmem:[%s336 + $0x2c] sm:$0xf]
        %v416 = vld [vmem:[%s336 + $0x30] sm:$0xf]
        %v417 = vld [vmem:[%s336 + $0x34] sm:$0xf]
        %v418 = vld [vmem:[%s336 + $0x38] sm:$0xf]
        %v419 = vld [vmem:[%s336 + $0x3c] sm:$0xf]
        %v420 = vld [vmem:[%s341] sm:$0xf]
        %v421 = vld [vmem:[%s341 + $0x4] sm:$0xf]
        %v422 = vld [vmem:[%s341 + $0x8] sm:$0xf]
        %v423 = vld [vmem:[%s341 + $0xc] sm:$0xf]
        %v424 = vld [vmem:[%s341 + $0x10] sm:$0xf]
        %v425 = vld [vmem:[%s341 + $0x14] sm:$0xf]
        %v426 = vld [vmem:[%s341 + $0x18] sm:$0xf]
        %v427 = vld [vmem:[%s341 + $0x1c] sm:$0xf]
        %v428 = vld [vmem:[%s341 + $0x20] sm:$0xf]
        %v429 = vld [vmem:[%s341 + $0x24] sm:$0xf]
        %v430 = vld [vmem:[%s341 + $0x28] sm:$0xf]
        %v431 = vld [vmem:[%s341 + $0x2c] sm:$0xf]
        %v432 = vld [vmem:[%s341 + $0x30] sm:$0xf]
        %v433 = vld [vmem:[%s341 + $0x34] sm:$0xf]
        %v434 = vld [vmem:[%s341 + $0x38] sm:$0xf]
        %v435 = vld [vmem:[%s341 + $0x3c] sm:$0xf]
        %v436 = vld [vmem:[%s344] sm:$0x1]
        %v438 = vlaneseq
        %v439 = vshrl.u32 %v438, 7
        %v440 = vsub.s32 0, %v439
        %v441 = vrot.slane %v436, %v440
        %v459 = vunpack.c.l.b16 %v404
        %v460 = vunpack.c.l.b16 %v405
        %v461 = vunpack.c.l.b16 %v406
        %v462 = vunpack.c.l.b16 %v407
        %v463 = vunpack.c.l.b16 %v408
        %v464 = vunpack.c.l.b16 %v409
        %v465 = vunpack.c.l.b16 %v410
        %v466 = vunpack.c.l.b16 %v411
        %v467 = vunpack.c.l.b16 %v412
        %v468 = vunpack.c.l.b16 %v413
        %v469 = vunpack.c.l.b16 %v414
        %v470 = vunpack.c.l.b16 %v415
        %v471 = vunpack.c.l.b16 %v416
        %v472 = vunpack.c.l.b16 %v417
        %v473 = vunpack.c.l.b16 %v418
        %v474 = vunpack.c.l.b16 %v419
        %v475 = vpack.c.b16 %v460, %v459
        %v476 = vpack.c.b16 %v462, %v461
        %v477 = vpack.c.b16 %v464, %v463
        %v478 = vpack.c.b16 %v466, %v465
        %v479 = vpack.c.b16 %v468, %v467
        %v480 = vpack.c.b16 %v470, %v469
        %v481 = vpack.c.b16 %v472, %v471
        %v482 = vpack.c.b16 %v474, %v473
        %491 = vmatprep.subr.bf16.mxu0 0
        %492 = vmatpush1.bf16.msra.mxu0 %v475
        %493 = vmatprep.subr.bf16.mxu0 0
        %494 = vmatpush1.bf16.msra.mxu0 %v476
        %495 = vmatprep.subr.bf16.mxu0 0
        %496 = vmatpush1.bf16.msra.mxu0 %v477
        %497 = vmatprep.subr.bf16.mxu0 0
        %498 = vmatpush1.bf16.msra.mxu0 %v478
        %499 = vmatprep.subr.bf16.mxu0 0
        %500 = vmatpush1.bf16.msra.mxu0 %v479
        %501 = vmatprep.subr.bf16.mxu0 0
        %502 = vmatpush1.bf16.msra.mxu0 %v480
        %503 = vmatprep.subr.bf16.mxu0 0
        %504 = vmatpush1.bf16.msra.mxu0 %v481
        %505 = vmatprep.subr.bf16.mxu0 0
        %506 = vmatpush1.bf16.msra.mxu0 %v482
        %507 = vmatprep.subr.bf16.mxu0 0
        %508 = vmatpush1.bf16.msra.mxu0 0
        %509 = vmatprep.subr.bf16.mxu0 0
        %510 = vmatpush1.bf16.msra.mxu0 0
        %511 = vmatprep.subr.bf16.mxu0 0
        %512 = vmatpush1.bf16.msra.mxu0 0
        %513 = vmatprep.subr.bf16.mxu0 0
        %514 = vmatpush1.bf16.msra.mxu0 0
        %515 = vmatprep.subr.bf16.mxu0 0
        %516 = vmatpush1.bf16.msra.mxu0 0
        %517 = vmatprep.subr.bf16.mxu0 0
        %518 = vmatpush1.bf16.msra.mxu0 0
        %519 = vmatprep.subr.bf16.mxu0 0
        %520 = vmatpush1.bf16.msra.mxu0 0
        %521 = vmatprep.subr.bf16.mxu0 0
        %522 = vmatpush1.bf16.msra.mxu0 0
        %523 = vmatprep.mubr.bf16.mxu0 0
        %524 = vmatmul.mubr.bf16.gmra.mrb[0].mxu0 %v402
        %v525 = vpop.f32.mrb[0].mxu0
        %v526 = vadd.f32 %v441, %v525
        %v527 = vpop.f32.mrb[0].mxu0
        %v528 = vpop.f32.mrb[0].mxu0
        %v529 = vadd.f32 %v441, %v528
        %v530 = vpop.f32.mrb[0].mxu0
        %531 = vmatprep.mubr.bf16.mxu0 0
        %532 = vmatmul.mubr.bf16.gmra.mrb[0].mxu0 %v403
        %v533 = vpop.f32.mrb[0].mxu0
        %v534 = vadd.f32 %v441, %v533
        %v535 = vpop.f32.mrb[0].mxu0
        %v536 = vpop.f32.mrb[0].mxu0
        %v537 = vadd.f32 %v441, %v536
        %v538 = vpop.f32.mrb[0].mxu0
        %539 = vdwg.mxu0
        %v556 = vunpack.c.l.b16 %v420
        %v557 = vunpack.c.l.b16 %v421
        %v558 = vunpack.c.l.b16 %v422
        %v559 = vunpack.c.l.b16 %v423
        %v560 = vunpack.c.l.b16 %v424
        %v561 = vunpack.c.l.b16 %v425
        %v562 = vunpack.c.l.b16 %v426
        %v563 = vunpack.c.l.b16 %v427
        %v564 = vunpack.c.l.b16 %v428
        %v565 = vunpack.c.l.b16 %v429
        %v566 = vunpack.c.l.b16 %v430
        %v567 = vunpack.c.l.b16 %v431
        %v568 = vunpack.c.l.b16 %v432
        %v569 = vunpack.c.l.b16 %v433
        %v570 = vunpack.c.l.b16 %v434
        %v571 = vunpack.c.l.b16 %v435
        %v572 = vpack.c.b16 %v557, %v556
        %v573 = vpack.c.b16 %v559, %v558
        %v574 = vpack.c.b16 %v561, %v560
        %v575 = vpack.c.b16 %v563, %v562
        %v576 = vpack.c.b16 %v565, %v564
        %v577 = vpack.c.b16 %v567, %v566
        %v578 = vpack.c.b16 %v569, %v568
        %v579 = vpack.c.b16 %v571, %v570
        %588 = vmatprep.subr.bf16.mxu0 0
        %589 = vmatpush1.bf16.msra.mxu0 %v572
        %590 = vmatprep.subr.bf16.mxu0 0
        %591 = vmatpush1.bf16.msra.mxu0 %v573
        %592 = vmatprep.subr.bf16.mxu0 0
        %593 = vmatpush1.bf16.msra.mxu0 %v574
        %594 = vmatprep.subr.bf16.mxu0 0
        %595 = vmatpush1.bf16.msra.mxu0 %v575
        %596 = vmatprep.subr.bf16.mxu0 0
        %597 = vmatpush1.bf16.msra.mxu0 %v576
        %598 = vmatprep.subr.bf16.mxu0 0
        %599 = vmatpush1.bf16.msra.mxu0 %v577
        %600 = vmatprep.subr.bf16.mxu0 0
        %601 = vmatpush1.bf16.msra.mxu0 %v578
        %602 = vmatprep.subr.bf16.mxu0 0
        %603 = vmatpush1.bf16.msra.mxu0 %v579
        %604 = vmatprep.subr.bf16.mxu0 0
        %605 = vmatpush1.bf16.msra.mxu0 0
        %606 = vmatprep.subr.bf16.mxu0 0
        %607 = vmatpush1.bf16.msra.mxu0 0
        %608 = vmatprep.subr.bf16.mxu0 0
        %609 = vmatpush1.bf16.msra.mxu0 0
        %610 = vmatprep.subr.bf16.mxu0 0
        %611 = vmatpush1.bf16.msra.mxu0 0
        %612 = vmatprep.subr.bf16.mxu0 0
        %613 = vmatpush1.bf16.msra.mxu0 0
        %614 = vmatprep.subr.bf16.mxu0 0
        %615 = vmatpush1.bf16.msra.mxu0 0
        %616 = vmatprep.subr.bf16.mxu0 0
        %617 = vmatpush1.bf16.msra.mxu0 0
        %618 = vmatprep.subr.bf16.mxu0 0
        %619 = vmatpush1.bf16.msra.mxu0 0
        %620 = vmatprep.mubr.bf16.mxu0 0
        %621 = vmatmul.mubr.bf16.gmra.mrb[0].mxu0 %v402
        %v622 = vpop.f32.mrb[0].mxu0
        %v623 = vadd.f32 0.0, %v622
        %v624 = vpop.f32.mrb[0].mxu0
        %v625 = vpop.f32.mrb[0].mxu0
        %v626 = vadd.f32 0.0, %v625
        %v627 = vpop.f32.mrb[0].mxu0
        %628 = vmatprep.mubr.bf16.mxu0 0
        %629 = vmatmul.mubr.bf16.gmra.mrb[0].mxu0 %v403
        %v630 = vpop.f32.mrb[0].mxu0
        %v631 = vadd.f32 0.0, %v630
        %v632 = vpop.f32.mrb[0].mxu0
        %v633 = vpop.f32.mrb[0].mxu0
        %v634 = vadd.f32 0.0, %v633
        %v635 = vpop.f32.mrb[0].mxu0
        %636 = vdwg.mxu0
        %637 = vxpose.xlu0.b32.start [1/16] %v623, 128
        %638 = vxpose.xlu0.b32.cont [2/16] %v626, 128
        %639 = vxpose.xlu0.b32.cont [3/16] 0.0, 128
        %640 = vxpose.xlu0.b32.cont [4/16] 0.0, 128
        %641 = vxpose.xlu0.b32.cont [5/16] 0.0, 128
        %642 = vxpose.xlu0.b32.cont [6/16] 0.0, 128
        %643 = vxpose.xlu0.b32.cont [7/16] 0.0, 128
        %644 = vxpose.xlu0.b32.cont [8/16] 0.0, 128
        %645 = vxpose.xlu0.b32.cont [9/16] 0.0, 128
        %646 = vxpose.xlu0.b32.cont [10/16] 0.0, 128
        %647 = vxpose.xlu0.b32.cont [11/16] 0.0, 128
        %648 = vxpose.xlu0.b32.cont [12/16] 0.0, 128
        %649 = vxpose.xlu0.b32.cont [13/16] 0.0, 128
        %650 = vxpose.xlu0.b32.cont [14/16] 0.0, 128
        %651 = vxpose.xlu0.b32.cont [15/16] 0.0, 128
        %652 = vxpose.xlu0.b32.end [16/16] 0.0, 128
        %v653 = vpop.trf.xlu0
        %v654 = vpop.trf.xlu0
        %v655 = vpop.trf.xlu0
        %v656 = vpop.trf.xlu0
        %v657 = vpop.trf.xlu0
        %v658 = vpop.trf.xlu0
        %v659 = vpop.trf.xlu0
        %v660 = vpop.trf.xlu0
        %v661 = vpop.trf.xlu0
        %v662 = vpop.trf.xlu0
        %v663 = vpop.trf.xlu0
        %v664 = vpop.trf.xlu0
        %v665 = vpop.trf.xlu0
        %v666 = vpop.trf.xlu0
        %v667 = vpop.trf.xlu0
        %v668 = vpop.trf.xlu0
        %669 = vxpose.xlu0.b32.start [1/16] %v631, 128
        %670 = vxpose.xlu0.b32.cont [2/16] %v634, 128
        %671 = vxpose.xlu0.b32.cont [3/16] 0.0, 128
        %672 = vxpose.xlu0.b32.cont [4/16] 0.0, 128
        %673 = vxpose.xlu0.b32.cont [5/16] 0.0, 128
        %674 = vxpose.xlu0.b32.cont [6/16] 0.0, 128
        %675 = vxpose.xlu0.b32.cont [7/16] 0.0, 128
        %676 = vxpose.xlu0.b32.cont [8/16] 0.0, 128
        %677 = vxpose.xlu0.b32.cont [9/16] 0.0, 128
        %678 = vxpose.xlu0.b32.cont [10/16] 0.0, 128
        %679 = vxpose.xlu0.b32.cont [11/16] 0.0, 128
        %680 = vxpose.xlu0.b32.cont [12/16] 0.0, 128
        %681 = vxpose.xlu0.b32.cont [13/16] 0.0, 128
        %682 = vxpose.xlu0.b32.cont [14/16] 0.0, 128
        %683 = vxpose.xlu0.b32.cont [15/16] 0.0, 128
        %684 = vxpose.xlu0.b32.end [16/16] 0.0, 128
        %v685 = vpop.trf.xlu0
        %v686 = vpop.trf.xlu0
        %v687 = vpop.trf.xlu0
        %v688 = vpop.trf.xlu0
        %v689 = vpop.trf.xlu0
        %v690 = vpop.trf.xlu0
        %v691 = vpop.trf.xlu0
        %v692 = vpop.trf.xlu0
        %v693 = vpop.trf.xlu0
        %v694 = vpop.trf.xlu0
        %v695 = vpop.trf.xlu0
        %v696 = vpop.trf.xlu0
        %v697 = vpop.trf.xlu0
        %v698 = vpop.trf.xlu0
        %v699 = vpop.trf.xlu0
        %v700 = vpop.trf.xlu0
        %vm701 = vcmask 130048
        %v702 = vsel %vm701, %v653, -inf
        %703 = vmax.xlane.f32.xlu0 %v702
        %v704 = vpop.xlane.xlu0 %703
        %v705 = vsel %vm701, %v685, -inf
        %706 = vmax.xlane.f32.xlu0 %v705
        %v707 = vpop.xlane.xlu0 %706
        %v708 = vsub.f32 %v653, %v704
        %v709 = vsub.f32 %v685, %v707
        %v710 = vmul.f32 %v708, 1.442695
        %v711 = vpow.pop %v710
        %v712 = vmul.f32 %v709, 1.442695
        %v713 = vpow.pop %v712
        %v714 = vsel %vm701, %v711, 0.0
        %715 = vadd.xlane.f32.xlu0 %v714
        %v716 = vpop.xlane.xlu0 %715
        %v717 = vsel %vm701, %v713, 0.0
        %718 = vadd.xlane.f32.xlu0 %v717
        %v719 = vpop.xlane.xlu0 %718
        %v720 = vrcp.pop %v716
        %v721 = vmul.f32 %v711, %v720
        %v722 = vrcp.pop %v719
        %v723 = vmul.f32 %v713, %v722
        %v724 = vpack.c.bf16 %v721, %v721
        %v725 = vpack.c.bf16 %v723, %v723
        %v726 = vpack.c.bf16 %v529, %v526
        %v727 = vpack.c.bf16 %v537, %v534
        %v729 = vsel %vm701, %v724, 0
        %731 = vmatprep.subr.bf16.mxu0 0
        %732 = vmatpush1.bf16.msra.mxu0 %v726
        %733 = vmatprep.subr.bf16.mxu0 0
        %734 = vmatpush1.bf16.msra.mxu0 0
        %735 = vmatprep.subr.bf16.mxu0 0
        %736 = vmatpush1.bf16.msra.mxu0 0
        %737 = vmatprep.subr.bf16.mxu0 0
        %738 = vmatpush1.bf16.msra.mxu0 0
        %739 = vmatprep.subr.bf16.mxu0 0
        %740 = vmatpush1.bf16.msra.mxu0 0
        %741 = vmatprep.subr.bf16.mxu0 0
        %742 = vmatpush1.bf16.msra.mxu0 0
        %743 = vmatprep.subr.bf16.mxu0 0
        %744 = vmatpush1.bf16.msra.mxu0 0
        %745 = vmatprep.subr.bf16.mxu0 0
        %746 = vmatpush1.bf16.msra.mxu0 0
        %747 = vmatprep.subr.bf16.mxu0 0
        %748 = vmatpush1.bf16.msra.mxu0 0
        %749 = vmatprep.subr.bf16.mxu0 0
        %750 = vmatpush1.bf16.msra.mxu0 0
        %751 = vmatprep.subr.bf16.mxu0 0
        %752 = vmatpush1.bf16.msra.mxu0 0
        %753 = vmatprep.subr.bf16.mxu0 0
        %754 = vmatpush1.bf16.msra.mxu0 0
        %755 = vmatprep.subr.bf16.mxu0 0
        %756 = vmatpush1.bf16.msra.mxu0 0
        %757 = vmatprep.subr.bf16.mxu0 0
        %758 = vmatpush1.bf16.msra.mxu0 0
        %759 = vmatprep.subr.bf16.mxu0 0
        %760 = vmatpush1.bf16.msra.mxu0 0
        %761 = vmatprep.subr.bf16.mxu0 0
        %762 = vmatpush1.bf16.msra.mxu0 0
        %763 = vmatprep.mubr.bf16.mxu0 0
        %764 = vmatmul.mubr.bf16.gmra.mrb[0].mxu0 %v729
        %v765 = vpop.f32.mrb[0].mxu0
        %v766 = vadd.f32 0.0, %v765
        %v767 = vpop.f32.mrb[0].mxu0
        %v768 = vpop.f32.mrb[0].mxu0
        %v769 = vpop.f32.mrb[0].mxu0
        %770 = vdwg.mxu0
        %v772 = vsel %vm701, %v725, 0
        %774 = vmatprep.subr.bf16.mxu0 0
        %775 = vmatpush1.bf16.msra.mxu0 %v727
        %776 = vmatprep.subr.bf16.mxu0 0
        %777 = vmatpush1.bf16.msra.mxu0 0
        %778 = vmatprep.subr.bf16.mxu0 0
        %779 = vmatpush1.bf16.msra.mxu0 0
        %780 = vmatprep.subr.bf16.mxu0 0
        %781 = vmatpush1.bf16.msra.mxu0 0
        %782 = vmatprep.subr.bf16.mxu0 0
        %783 = vmatpush1.bf16.msra.mxu0 0
        %784 = vmatprep.subr.bf16.mxu0 0
        %785 = vmatpush1.bf16.msra.mxu0 0
        %786 = vmatprep.subr.bf16.mxu0 0
        %787 = vmatpush1.bf16.msra.mxu0 0
        %788 = vmatprep.subr.bf16.mxu0 0
        %789 = vmatpush1.bf16.msra.mxu0 0
        %790 = vmatprep.subr.bf16.mxu0 0
        %791 = vmatpush1.bf16.msra.mxu0 0
        %792 = vmatprep.subr.bf16.mxu0 0
        %793 = vmatpush1.bf16.msra.mxu0 0
        %794 = vmatprep.subr.bf16.mxu0 0
        %795 = vmatpush1.bf16.msra.mxu0 0
        %796 = vmatprep.subr.bf16.mxu0 0
        %797 = vmatpush1.bf16.msra.mxu0 0
        %798 = vmatprep.subr.bf16.mxu0 0
        %799 = vmatpush1.bf16.msra.mxu0 0
        %800 = vmatprep.subr.bf16.mxu0 0
        %801 = vmatpush1.bf16.msra.mxu0 0
        %802 = vmatprep.subr.bf16.mxu0 0
        %803 = vmatpush1.bf16.msra.mxu0 0
        %804 = vmatprep.subr.bf16.mxu0 0
        %805 = vmatpush1.bf16.msra.mxu0 0
        %806 = vmatprep.mubr.bf16.mxu0 0
        %807 = vmatmul.mubr.bf16.gmra.mrb[0].mxu0 %v772
        %v808 = vpop.f32.mrb[0].mxu0
        %v809 = vadd.f32 0.0, %v808
        %v810 = vpop.f32.mrb[0].mxu0
        %v811 = vpop.f32.mrb[0].mxu0
        %v812 = vpop.f32.mrb[0].mxu0
        %813 = vdwg.mxu0
        %814 = vadd.xlane.f32.xlu0 %v766
        %v815 = vpop.xlane.xlu0 %814
        %816 = vadd.xlane.f32.xlu0 %v809
        %v817 = vpop.xlane.xlu0 %816
        %v818 = vmul.f32 %v815, %v365
        %v819 = vmul.f32 %v817, %v365
        %v820 = vsub.f32 %v766, %v818
        %v821 = vsub.f32 %v809, %v819
        %v822 = vmul.f32 %v820, %v820
        %v823 = vmul.f32 %v821, %v821
        %824 = vadd.xlane.f32.xlu0 %v822
        %v825 = vpop.xlane.xlu0 %824
        %826 = vadd.xlane.f32.xlu0 %v823
        %v827 = vpop.xlane.xlu0 %826
        %v828 = vmul.f32 %v825, %v365
        %v829 = vmul.f32 %v827, %v365
        %v830 = vadd.f32 %v828, 1e-05
        %v831 = vadd.f32 %v829, 1e-05
        %v832 = vrsqrt.pop %v830
        %v833 = vrsqrt.pop %v831
        %v834 = vmul.f32 %v820, %v832
        %v835 = vmul.f32 %v821, %v833
        %v836 = vld [vmem:[%s347] sm:$0x1]
        %v838 = vlaneseq
        %v839 = vshrl.u32 %v838, 7
        %v840 = vsub.s32 0, %v839
        %v841 = vrot.slane %v836, %v840
        %v843 = vmul.f32 %v834, %v841
        %v844 = vmul.f32 %v835, %v841
        %v845 = vld [vmem:[%s350] sm:$0x1]
        %v847 = vlaneseq
        %v848 = vshrl.u32 %v847, 7
        %v849 = vsub.s32 0, %v848
        %v850 = vrot.slane %v845, %v849
        %v852 = vadd.f32 %v843, %v850
        %v853 = vadd.f32 %v844, %v850
        %854 = vst [vmem:[%s330] sm:$0xff] %v852
        %855 = vst [vmem:[%s330 + $0x8] sm:$0xff] %v853
        %s856 = sand.u32 %s199, 1
        %s857 = scalar_lea.sflag [#allocation4], %s856
        %s858 = sand.u32 %s199, 1
        %s859 = smul.addr %s858, 16
        %s860 = scalar_lea.vmem [#allocation5], %s859
        // Predicated region
        $region49: #{tpu_custom_call.1} parent=43 // pred_check
          %p861 = pneg %p209
        $region50: #{tpu_custom_call.1} parent=43 // pred_check_branch
          %863 = sbr.rel (%p861) target = $region52
        $region51: #{tpu_custom_call.1} parent=43 // pred_region
          %s864 = smul.u32 2, %s26
          %s866 = ssub.s32 256, 256
          %867 = vsyncadd %s857, %s866
          %s868 = smul.addr %s25, 2
          %s869 = sadd.s32 %s864, %s868
          %s870 = smul.addr %s869, 128
          %s871 = scalar_lea.hbm %s6, %s870
          %s872 = sshll.u32 %s860, 4
          %s873 = int_to_ptr.vmem [resolvable:$true] %s872
          %878 = dma.vmem_to_hbm [thread:$0]  %s873, 256, %s871, %s857, 128, 128, 8
        $region52: #{tpu_custom_call.1} parent=43 // pred_fallthru
          _
      $region44: #{tpu_custom_call.1} parent=5 // pred_fallthru
        _
      %p879 = scmp.le.s32.totalorder 2, %s16
      // Predicated region
      $region53: #{tpu_custom_call.1} parent=5 // pred_check
        %p880 = pneg %p879
      $region54: #{tpu_custom_call.1} parent=5 // pred_check_branch
        %882 = sbr.rel (%p880) target = $region56
      $region55: #{tpu_custom_call.1} parent=5 // pred_region
        %s883 = ssub.s32 %s16, 2
        // Predicated region
        $region57: #{tpu_custom_call.1} parent=55 // pred_check
          %p884 = pneg %p215
        $region58: #{tpu_custom_call.1} parent=55 // pred_check_branch
          %886 = sbr.rel (%p884) target = $region60
        $region59: #{tpu_custom_call.1} parent=55 // pred_region
          %s887 = sand.u32 %s200, 1
          %s888 = scalar_lea.sflag [#allocation4], %s887
          %s889 = sand.u32 %s200, 1
          %s890 = smul.addr %s889, 16
          %s891 = scalar_lea.vmem [#allocation5], %s890
          %892 = dma.done %s888, 256
        $region60: #{tpu_custom_call.1} parent=55 // pred_fallthru
          _
      $region56: #{tpu_custom_call.1} parent=5 // pred_fallthru
        _
    $region6: #{tpu_custom_call.1} parent=1 // loop_footer
      %s20 = sadd.s32 1, %s16
    $region7: #{tpu_custom_call.1} parent=1 // loop_footer_branch
      %15 = sbr.rel target = $region3
    $region8: #{tpu_custom_call.1} parent=1 // loop_exit
      _
    %893 = vsyncpa [#allocation3], 1
    %s894 = scalar_lea.sflag [#allocation3], 1
    %895 = vsyncpa %s894, 1
    %896 = vsyncpa [#allocation4], 1
    %s897 = scalar_lea.sflag [#allocation4], 1
    %898 = vsyncpa %s897, 1

</llo_original>
